<compile_context>
chip_gen: v7x
topology: tpu7x:2x2x1
jax: 0.10.0
libtpu: 0.0.40
codegen_flags: <defaults>
</compile_context>

<pallas_src>
import math

import jax
import jax.numpy as jnp
from jax.experimental import pallas as pl
from jax.experimental.pallas import tpu as pltpu


_STEP_TARGET_BYTES = 4 * 1024 * 1024   # per-step double-buffered working set target
_LANE = 128
_MAX_LANE_TILE = 16384


# ---------------------------------------------------------------------------
# Kernel bodies
# ---------------------------------------------------------------------------
def _make_concat_kernel(concat_axis, channels):
    """Returns kernel(*x_refs, o_ref): copy every input block into its static
    offset along `concat_axis` of the output block.  Offsets are Python ints,
    so every slice is a compile-time view (no dynamic indexing)."""

    def kernel(*refs):
        *x_refs, o_ref = refs
        off = 0
        for x_ref, c in zip(x_refs, channels):
            if concat_axis == 1:      # channel (sublane) concat
                o_ref[:, off:off + c, :] = x_ref[...]
            else:                     # lane (last-axis) concat
                o_ref[:, :, off:off + c] = x_ref[...]
            off += c

    return kernel


# ---------------------------------------------------------------------------
# Tiling helpers
# ---------------------------------------------------------------------------
def _largest_divisor_leq(n, cap, multiple_of=1):
    cap = min(n, max(1, cap))
    for d in range(cap, 0, -1):
        if n % d == 0 and d % multiple_of == 0:
            return d
    return 0


# ---------------------------------------------------------------------------
# Path 1: concat along the "channel" axis of [outer, C_i, inner], inner > 1
# ---------------------------------------------------------------------------
def _concat_channel_path(xs3d, cs, total_c):
    outer, _, inner = xs3d[0].shape
    dtype = xs3d[0].dtype
    itemsize = jnp.dtype(dtype).itemsize
    per_lane = 4 * total_c * itemsize          # 2 bufs * (inputs + output) per lane

    if inner % _LANE == 0:
        cap = max(_LANE, (_STEP_TARGET_BYTES // max(1, per_lane)) // _LANE * _LANE)
        ts = max(_LANE, min(inner, cap, _MAX_LANE_TILE))
        while inner % ts:              # terminates at 128 since 128 | inner
            ts -= _LANE
    else:
        # TODO(synk): inner not a multiple of 128 forces a full-width lane
        #             block; pathological (huge inner * many channels) shapes
        #             could exceed VMEM here — channel-tiled blocks would fix it.
        ts = inner

    n_lane_tiles = inner // ts
    to = 1
    if n_lane_tiles == 1 and outer > 1:
        # Small inner: batch several outer rows per step to amortize the
        # ~0.35us/step grid overhead, but keep >= 2 grid steps for pipelining.
        max_to = max(1, _STEP_TARGET_BYTES // max(1, per_lane * ts))
        to = max(1, _largest_divisor_leq(outer, min(max_to, outer // 2)))

    grid = (outer // to, n_lane_tiles)
    in_specs = [pl.BlockSpec((to, c, ts), lambda n, s: (n, 0, s)) for c in cs]
    out_specs = pl.BlockSpec((to, total_c, ts), lambda n, s: (n, 0, s))

    return pl.pallas_call(
        _make_concat_kernel(1, cs),
        out_shape=jax.ShapeDtypeStruct((outer, total_c, inner), dtype),
        grid=grid,
        in_specs=in_specs,
        out_specs=out_specs,
        compiler_params=pltpu.CompilerParams(
            dimension_semantics=("parallel", "parallel")),
    )(*xs3d)


# ---------------------------------------------------------------------------
# Path 2: concat along the LAST axis (inner == 1) -> lane concat on [1, outer, C_i]
# ---------------------------------------------------------------------------
def _concat_lane_path(xs3d, cs, total_c):
    outer = xs3d[0].shape[1]
    dtype = xs3d[0].dtype
    itemsize = jnp.dtype(dtype).itemsize
    per_row = 4 * total_c * itemsize

    max_to = max(1, _STEP_TARGET_BYTES // max(1, per_row))
    cap = min(max_to, outer // 2) if outer > 1 else 1
    # Sublane tile must be a multiple of 8, otherwise fall back to full extent.
    too = _largest_divisor_leq(outer, cap, multiple_of=8)
    if too == 0:
        too = outer

    grid = (outer // too,)
    in_specs = [pl.BlockSpec((1, too, c), lambda n: (0, n, 0)) for c in cs]
    out_specs = pl.BlockSpec((1, too, total_c), lambda n: (0, n, 0))

    return pl.pallas_call(
        _make_concat_kernel(2, cs),
        out_shape=jax.ShapeDtypeStruct((1, outer, total_c), dtype),
        grid=grid,
        in_specs=in_specs,
        out_specs=out_specs,
        compiler_params=pltpu.CompilerParams(
            dimension_semantics=("parallel",)),
    )(*xs3d)


# ---------------------------------------------------------------------------
# Public forward: mirrors Concat.forward(x) == torch.cat(x, dim)
# ---------------------------------------------------------------------------
def concat_forward(xs, dimension=1):
    xs = list(xs)
    assert len(xs) >= 1, "Concat needs at least one tensor"
    if len(xs) == 1:
        return xs[0]

    rank = xs[0].ndim
    d = dimension % rank
    ref_shape = xs[0].shape
    dtype = xs[0].dtype
    for x in xs[1:]:
        assert x.ndim == rank, "rank mismatch in Concat"
        assert x.dtype == dtype, "dtype mismatch in Concat"
        for ax in range(rank):
            if ax != d:
                assert x.shape[ax] == ref_shape[ax], "non-concat dim mismatch"

    outer = math.prod(ref_shape[:d])
    inner = math.prod(ref_shape[d + 1:])
    cs = [x.shape[d] for x in xs]
    total_c = sum(cs)
    out_shape = ref_shape[:d] + (total_c,) + ref_shape[d + 1:]

    if inner == 1:
        # Concat along the last axis: lay out as [1, outer, C_i] so the concat
        # axis is the lane axis (avoids 1-lane tiles).
        xs_c = [x.reshape(1, outer, c) for x, c in zip(xs, cs)]
        out = _concat_lane_path(xs_c, cs, total_c)
    else:
        # Free, contiguous reshape to the canonical 3D form.
        xs_c = [x.reshape(outer, c, inner) for x, c in zip(xs, cs)]
        out = _concat_channel_path(xs_c, cs, total_c)

    return out.reshape(out_shape)


# ---------------------------------------------------------------------------
if __name__ == "__main__":
    key = jax.random.PRNGKey(0)
    k0, k1, k2, k3, k4 = jax.random.split(key, 5)

    # Case 1: NCHW feature-map concat along channels (Concat default dim=1).
    N, H, W = 2, 16, 16
    xs = [
        jax.random.normal(k0, (N, 4, H, W), jnp.float32),
        jax.random.normal(k1, (N, 6, H, W), jnp.float32),
        jax.random.normal(k2, (N, 2, H, W), jnp.float32),
    ]
    out = jax.block_until_ready(concat_forward(xs, dimension=1))
    ref = jnp.concatenate(xs, axis=1)
    assert out.shape == ref.shape == (N, 12, H, W)
    assert jnp.array_equal(out, ref)

    # Case 2: concat along the last axis (exercises the lane-concat path).
    ys = [
        jax.random.normal(k3, (2, 8, 4), jnp.float32),
        jax.random.normal(k4, (2, 8, 6), jnp.float32),
    ]
    out2 = jax.block_until_ready(concat_forward(ys, dimension=-1))
    ref2 = jnp.concatenate(ys, axis=-1)
    assert out2.shape == ref2.shape == (2, 8, 10)
    assert jnp.array_equal(out2, ref2)

    print("KERNEL_OK")
</pallas_src>

<mosaic_0001>
module attributes {stable_mosaic.version = 11 : i64} {
  func.func @kernel(%arg0: i32, %arg1: i32, %arg2: memref<1x4x256xf32, #tpu.memory_space<vmem>>, %arg3: memref<1x6x256xf32, #tpu.memory_space<vmem>>, %arg4: memref<1x2x256xf32, #tpu.memory_space<vmem>>, %arg5: memref<1x12x256xf32, #tpu.memory_space<vmem>>) attributes {dimension_semantics = [#tpu.dimension_semantics<parallel>, #tpu.dimension_semantics<parallel>], iteration_bounds = array<i64: 2, 1>, scalar_prefetch = 0 : i64, scratch_operands = 0 : i64, tpu.core_type = #tpu.core_type<tc>, window_params = [{transform_indices = @transform_0, window_bounds = array<i64: 1, 4, 256>}, {transform_indices = @transform_1, window_bounds = array<i64: 1, 6, 256>}, {transform_indices = @transform_2, window_bounds = array<i64: 1, 2, 256>}, {transform_indices = @transform_3, window_bounds = array<i64: 1, 12, 256>}]} {
    %c0 = arith.constant 0 : index
    %c0_0 = arith.constant 0 : index
    %c0_1 = arith.constant 0 : index
    %0 = vector.load %arg2[%c0, %c0_0, %c0_1] : memref<1x4x256xf32, #tpu.memory_space<vmem>>, vector<1x4x256xf32>
    %c0_2 = arith.constant 0 : index
    %c0_3 = arith.constant 0 : index
    %c0_4 = arith.constant 0 : index
    %1 = vector.load %arg5[%c0_2, %c0_3, %c0_4] : memref<1x12x256xf32, #tpu.memory_space<vmem>>, vector<1x4x256xf32>
    tpu.vector_store %arg5[%c0_2, %c0_3, %c0_4], %0 {strides = array<i32>} : memref<1x12x256xf32, #tpu.memory_space<vmem>>, vector<1x4x256xf32>,
    %c0_5 = arith.constant 0 : index
    %c0_6 = arith.constant 0 : index
    %c0_7 = arith.constant 0 : index
    %2 = vector.load %arg3[%c0_5, %c0_6, %c0_7] : memref<1x6x256xf32, #tpu.memory_space<vmem>>, vector<1x6x256xf32>
    %c0_8 = arith.constant 0 : index
    %c4 = arith.constant 4 : index
    %c0_9 = arith.constant 0 : index
    %3 = vector.load %arg5[%c0_8, %c4, %c0_9] : memref<1x12x256xf32, #tpu.memory_space<vmem>>, vector<1x6x256xf32>
    tpu.vector_store %arg5[%c0_8, %c4, %c0_9], %2 {strides = array<i32>} : memref<1x12x256xf32, #tpu.memory_space<vmem>>, vector<1x6x256xf32>,
    %c0_10 = arith.constant 0 : index
    %c0_11 = arith.constant 0 : index
    %c0_12 = arith.constant 0 : index
    %4 = vector.load %arg4[%c0_10, %c0_11, %c0_12] : memref<1x2x256xf32, #tpu.memory_space<vmem>>, vector<1x2x256xf32>
    %c0_13 = arith.constant 0 : index
    %c10 = arith.constant 10 : index
    %c0_14 = arith.constant 0 : index
    %5 = vector.load %arg5[%c0_13, %c10, %c0_14] : memref<1x12x256xf32, #tpu.memory_space<vmem>>, vector<1x2x256xf32>
    tpu.vector_store %arg5[%c0_13, %c10, %c0_14], %4 {strides = array<i32>} : memref<1x12x256xf32, #tpu.memory_space<vmem>>, vector<1x2x256xf32>,
    return
  }
  func.func @transform_0(%arg0: i32, %arg1: i32) -> (i32, i32, i32) {
    %c0_i32 = arith.constant 0 : i32
    %c0_i32_0 = arith.constant 0 : i32
    return %arg0, %c0_i32, %arg1 : i32, i32, i32
  }
  func.func @transform_1(%arg0: i32, %arg1: i32) -> (i32, i32, i32) {
    %c0_i32 = arith.constant 0 : i32
    %c0_i32_0 = arith.constant 0 : i32
    return %arg0, %c0_i32, %arg1 : i32, i32, i32
  }
  func.func @transform_2(%arg0: i32, %arg1: i32) -> (i32, i32, i32) {
    %c0_i32 = arith.constant 0 : i32
    %c0_i32_0 = arith.constant 0 : i32
    return %arg0, %c0_i32, %arg1 : i32, i32, i32
  }
  func.func @transform_3(%arg0: i32, %arg1: i32) -> (i32, i32, i32) {
    %c0_i32 = arith.constant 0 : i32
    %c0_i32_0 = arith.constant 0 : i32
    return %arg0, %c0_i32, %arg1 : i32, i32, i32
  }
}

</mosaic_0001>

<llo_original>
// kernel: tpu_custom_call.1
$region0: #{tpu_custom_call.1}
  #allocation0 [shape = 'u32[]', space=smem, size = 0x4, offset = 0x4, fixed_abs, tag = 'smem constant byte address 0x4 - core index']
  #allocation1 [shape = 'u32[144,128]{1,0:T(1,128)}', space=vmem, size = 0x12000, scoped, tag = 'internal scratch']
  %s0 = inlined_call_operand.vmem [shape: f32[2,4,256], index: 0, kind: input, shape index: {}]
  %s1 = inlined_call_operand.vmem [shape: f32[2,6,256], index: 1, kind: input, shape index: {}]
  %s2 = inlined_call_operand.vmem [shape: f32[2,2,256], index: 2, kind: input, shape index: {}]
  %s3 = inlined_call_operand.vmem [shape: f32[2,12,256], index: 3, kind: output, shape index: {}]
  %s4 = sld [smem:[#allocation0]]
  $region45: #{tpu_custom_call.1} parent=0
    _
  %s6 = ssub.s32 1, %s4
  %s7 = scalar_select 0, %s6, %s4
  loop: start=0, step=1, limit=4
  $region2: #{tpu_custom_call.1} parent=0 // loop_pre_header
    _
  $region3: #{tpu_custom_call.1} parent=0 // loop_header
    %s9 = sphi 0, %s13
    %p10 = scmp.ge.s32.totalorder %s9, 4
    %s16 = sphi 0, %s28
    %s17 = sphi 0, %s24
    %s18 = sphi 0, %s16
    %s19 = sphi 0, %s17
    %s20 = sphi 0, %s18
    %s21 = sphi 0, %s19
    %s33 = sphi 0, %s35
    %s36 = sphi 0, %s33
    %s37 = sphi 0, %s36
    %s53 = sphi 0, %s37
    %s61 = sphi 0, %s63
    %s64 = sphi 0, %s61
    %s65 = sphi 0, %s64
    %s81 = sphi 0, %s65
    %s89 = sphi 0, %s91
    %s92 = sphi 0, %s89
    %s93 = sphi 0, %s92
    %s109 = sphi 0, %s93
    %s117 = sphi 0, %s119
    %s120 = sphi 0, %s117
    %s121 = sphi 0, %s120
    %s137 = sphi 0, %s121
  $region4: #{tpu_custom_call.1} parent=0 // loop_header_branch
    %12 = sbr.rel (%p10) target = $region8
  $region5: #{tpu_custom_call.1} parent=0 // loop_body
    %s14 = ssub.s32 %s9, 1
    %s15 = ssub.s32 %s9, 2
    %s22 = sadd.s32 1, %s17
    %p23 = scmp.ge.s32.totalorder %s22, 1
    %s24 = scalar_select %p23, 0, %s22
    %s25 = sadd.s32 1, %s16
    %s26 = scalar_select %p23, %s25, %s16
    %p27 = scmp.ge.s32.totalorder %s26, 2
    %s28 = scalar_select %p27, 0, %s26
    %s29 = ssub.s32 %s16, %s28
    %s30 = ssub.s32 %s17, %s24
    %s31 = sor.u32 %s29, %s30
    %p32 = scmp.eq.s32.totalorder %s31, 0
    %s34 = sadd.s32 %s33, 1
    %s35 = scalar_select %p32, %s33, %s34
    %p38 = pneg %p32
    %p39 = scmp.eq.s32.totalorder %s9, 1
    %p40 = por %p38, %p39
    %p41 = scmp.ne.s32.totalorder %s33, %s36
    %p42 = scmp.eq.s32.totalorder %s9, 0
    %p43 = por %p41, %p42
    %p44 = scmp.ne.s32.totalorder %s33, %s36
    %p45 = scmp.eq.s32.totalorder %s14, 1
    %p46 = por %p44, %p45
    %p47 = scmp.ne.s32.totalorder %s36, %s37
    %p48 = scmp.eq.s32.totalorder %s14, 0
    %p49 = por %p47, %p48
    %p50 = scmp.ne.s32.totalorder %s36, %s37
    %p51 = scmp.eq.s32.totalorder %s15, 1
    %p52 = por %p50, %p51
    %p54 = scmp.ne.s32.totalorder %s37, %s53
    %p55 = scmp.eq.s32.totalorder %s15, 0
    %p56 = por %p54, %p55
    %s57 = ssub.s32 %s16, %s28
    %s58 = ssub.s32 %s17, %s24
    %s59 = sor.u32 %s57, %s58
    %p60 = scmp.eq.s32.totalorder %s59, 0
    %s62 = sadd.s32 %s61, 1
    %s63 = scalar_select %p60, %s61, %s62
    %p66 = pneg %p60
    %p67 = scmp.eq.s32.totalorder %s9, 1
    %p68 = por %p66, %p67
    %p69 = scmp.ne.s32.totalorder %s61, %s64
    %p70 = scmp.eq.s32.totalorder %s9, 0
    %p71 = por %p69, %p70
    %p72 = scmp.ne.s32.totalorder %s61, %s64
    %p73 = scmp.eq.s32.totalorder %s14, 1
    %p74 = por %p72, %p73
    %p75 = scmp.ne.s32.totalorder %s64, %s65
    %p76 = scmp.eq.s32.totalorder %s14, 0
    %p77 = por %p75, %p76
    %p78 = scmp.ne.s32.totalorder %s64, %s65
    %p79 = scmp.eq.s32.totalorder %s15, 1
    %p80 = por %p78, %p79
    %p82 = scmp.ne.s32.totalorder %s65, %s81
    %p83 = scmp.eq.s32.totalorder %s15, 0
    %p84 = por %p82, %p83
    %s85 = ssub.s32 %s16, %s28
    %s86 = ssub.s32 %s17, %s24
    %s87 = sor.u32 %s85, %s86
    %p88 = scmp.eq.s32.totalorder %s87, 0
    %s90 = sadd.s32 %s89, 1
    %s91 = scalar_select %p88, %s89, %s90
    %p94 = pneg %p88
    %p95 = scmp.eq.s32.totalorder %s9, 1
    %p96 = por %p94, %p95
    %p97 = scmp.ne.s32.totalorder %s89, %s92
    %p98 = scmp.eq.s32.totalorder %s9, 0
    %p99 = por %p97, %p98
    %p100 = scmp.ne.s32.totalorder %s89, %s92
    %p101 = scmp.eq.s32.totalorder %s14, 1
    %p102 = por %p100, %p101
    %p103 = scmp.ne.s32.totalorder %s92, %s93
    %p104 = scmp.eq.s32.totalorder %s14, 0
    %p105 = por %p103, %p104
    %p106 = scmp.ne.s32.totalorder %s92, %s93
    %p107 = scmp.eq.s32.totalorder %s15, 1
    %p108 = por %p106, %p107
    %p110 = scmp.ne.s32.totalorder %s93, %s109
    %p111 = scmp.eq.s32.totalorder %s15, 0
    %p112 = por %p110, %p111
    %s113 = ssub.s32 %s16, %s28
    %s114 = ssub.s32 %s17, %s24
    %s115 = sor.u32 %s113, %s114
    %p116 = scmp.eq.s32.totalorder %s115, 0
    %s118 = sadd.s32 %s117, 1
    %s119 = scalar_select %p116, %s117, %s118
    %p122 = pneg %p116
    %p123 = scmp.eq.s32.totalorder %s9, 1
    %p124 = por %p122, %p123
    %p125 = scmp.ne.s32.totalorder %s117, %s120
    %p126 = scmp.eq.s32.totalorder %s9, 0
    %p127 = por %p125, %p126
    %p128 = scmp.ne.s32.totalorder %s117, %s120
    %p129 = scmp.eq.s32.totalorder %s14, 1
    %p130 = por %p128, %p129
    %p131 = scmp.ne.s32.totalorder %s120, %s121
    %p132 = scmp.eq.s32.totalorder %s14, 0
    %p133 = por %p131, %p132
    %p134 = scmp.ne.s32.totalorder %s120, %s121
    %p135 = scmp.eq.s32.totalorder %s15, 1
    %p136 = por %p134, %p135
    %p138 = scmp.ne.s32.totalorder %s121, %s137
    %p139 = scmp.eq.s32.totalorder %s15, 0
    %p140 = por %p138, %p139
    %p141 = scmp.le.s32.totalorder 1, %s9
    %p142 = scmp.lt.s32.totalorder %s9, 3
    %p143 = pnand %p141, %p142
    %p144 = pneg %p143
    // Predicated region
    $region9: #{tpu_custom_call.1} parent=5 // pred_check
      _
    $region10: #{tpu_custom_call.1} parent=5 // pred_check_branch
      %146 = sbr.rel (%p143) target = $region12
    $region11: #{tpu_custom_call.1} parent=5 // pred_region
      %s147 = ssub.s32 %s9, 1
    $region12: #{tpu_custom_call.1} parent=5 // pred_fallthru
      _
    %p148 = scmp.lt.s32.totalorder %s9, 2
    // Predicated region
    $region13: #{tpu_custom_call.1} parent=5 // pred_check
      %p149 = pneg %p148
    $region14: #{tpu_custom_call.1} parent=5 // pred_check_branch
      %151 = sbr.rel (%p149) target = $region16
    $region15: #{tpu_custom_call.1} parent=5 // pred_region
      // Predicated region
      $region17: #{tpu_custom_call.1} parent=15 // pred_check
        %p152 = pneg %p43
      $region18: #{tpu_custom_call.1} parent=15 // pred_check_branch
        %154 = sbr.rel (%p152) target = $region20
      $region19: #{tpu_custom_call.1} parent=15 // pred_region
        %s155 = smul.u32 2, %s17
        %p156 = scmp.lt.s32.totalorder %s16, 1
        %s157 = scalar_select %p156, %s16, 1
        %p158 = scmp.lt.s32.totalorder %s155, 1
        %s159 = scalar_select %p158, %s155, 1
        %s160 = smul.addr %s157, 2
        %s161 = sadd.s32 %s159, %s160
        %s162 = smul.addr %s161, 4
        %s163 = scalar_lea.vmem %s0, %s162
        %s164 = smul.u32 2, %s17
      $region20: #{tpu_custom_call.1} parent=15 // pred_fallthru
        _
      // Predicated region
      $region21: #{tpu_custom_call.1} parent=15 // pred_check
        %p165 = pneg %p71
      $region22: #{tpu_custom_call.1} parent=15 // pred_check_branch
        %167 = sbr.rel (%p165) target = $region24
      $region23: #{tpu_custom_call.1} parent=15 // pred_region
        %s168 = smul.u32 2, %s17
        %p169 = scmp.lt.s32.totalorder %s16, 1
        %s170 = scalar_select %p169, %s16, 1
        %p171 = scmp.lt.s32.totalorder %s168, 1
        %s172 = scalar_select %p171, %s168, 1
        %s173 = smul.addr %s170, 2
        %s174 = sadd.s32 %s172, %s173
        %s175 = smul.addr %s174, 8
        %s176 = scalar_lea.vmem %s1, %s175
        %s177 = smul.u32 2, %s17
      $region24: #{tpu_custom_call.1} parent=15 // pred_fallthru
        _
      // Predicated region
      $region25: #{tpu_custom_call.1} parent=15 // pred_check
        %p178 = pneg %p99
      $region26: #{tpu_custom_call.1} parent=15 // pred_check_branch
        %180 = sbr.rel (%p178) target = $region28
      $region27: #{tpu_custom_call.1} parent=15 // pred_region
        %s181 = smul.u32 2, %s17
        %p182 = scmp.lt.s32.totalorder %s16, 1
        %s183 = scalar_select %p182, %s16, 1
        %p184 = scmp.lt.s32.totalorder %s181, 1
        %s185 = scalar_select %p184, %s181, 1
        %s186 = smul.addr %s183, 2
        %s187 = sadd.s32 %s185, %s186
        %s188 = smul.addr %s187, 2
        %s189 = scalar_lea.vmem %s2, %s188
        %s190 = smul.u32 2, %s17
      $region28: #{tpu_custom_call.1} parent=15 // pred_fallthru
        _
    $region16: #{tpu_custom_call.1} parent=5 // pred_fallthru
      _
    %p191 = scmp.le.s32.totalorder 1, %s9
    %p192 = scmp.lt.s32.totalorder %s9, 3
    %p193 = pnand %p191, %p192
    %p194 = pneg %p193
    // Predicated region
    $region29: #{tpu_custom_call.1} parent=5 // pred_check
      _
    $region30: #{tpu_custom_call.1} parent=5 // pred_check_branch
      %196 = sbr.rel (%p193) target = $region32
    $region31: #{tpu_custom_call.1} parent=5 // pred_region
      %s197 = ssub.s32 %s9, 1
      %s198 = smul.u32 2, %s19
      %p199 = scmp.lt.s32.totalorder %s18, 1
      %s200 = scalar_select %p199, %s18, 1
      %p201 = scmp.lt.s32.totalorder %s198, 1
      %s202 = scalar_select %p201, %s198, 1
      %s203 = smul.addr %s200, 2
      %s204 = sadd.s32 %s202, %s203
      %s205 = smul.addr %s204, 4
      %s206 = scalar_lea.vmem %s0, %s205
      %p207 = pneg %p49
      %p208 = pneg %p46
      %s209 = smul.u32 2, %s19
      %p210 = scmp.lt.s32.totalorder %s18, 1
      %s211 = scalar_select %p210, %s18, 1
      %p212 = scmp.lt.s32.totalorder %s209, 1
      %s213 = scalar_select %p212, %s209, 1
      %s214 = smul.addr %s211, 2
      %s215 = sadd.s32 %s213, %s214
      %s216 = smul.addr %s215, 8
      %s217 = scalar_lea.vmem %s1, %s216
      %p218 = pneg %p77
      %p219 = pneg %p74
      %s220 = smul.u32 2, %s19
      %p221 = scmp.lt.s32.totalorder %s18, 1
      %s222 = scalar_select %p221, %s18, 1
      %p223 = scmp.lt.s32.totalorder %s220, 1
      %s224 = scalar_select %p223, %s220, 1
      %s225 = smul.addr %s222, 2
      %s226 = sadd.s32 %s224, %s225
      %s227 = smul.addr %s226, 2
      %s228 = scalar_lea.vmem %s2, %s227
      %p229 = pneg %p105
      %p230 = pneg %p102
      %p231 = pneg %p133
      %p232 = pneg %p130
      %s233 = smul.u32 2, %s19
      %p234 = scmp.lt.s32.totalorder %s18, 1
      %s235 = scalar_select %p234, %s18, 1
      %p236 = scmp.lt.s32.totalorder %s233, 1
      %s237 = scalar_select %p236, %s233, 1
      %s238 = smul.addr %s235, 4
      %s239 = sadd.s32 %s237, %s238
      %s240 = smul.addr %s239, 8
      %s241 = scalar_lea.vmem %s3, %s240
      %s242 = smul.u32 2, %s19
      %p243 = scmp.lt.s32.totalorder %s18, 1
      %s244 = scalar_select %p243, %s18, 1
      %p245 = scmp.lt.s32.totalorder %s242, 1
      %s246 = scalar_select %p245, %s242, 1
      %s247 = smul.addr %s244, 2
      %s248 = sadd.s32 %s246, %s247
      %s249 = smul.addr %s248, 4
      %s250 = scalar_lea.vmem %s0, %s249
      %s251 = smul.u32 2, %s19
      %s252 = smul.u32 2, %s19
      %p253 = scmp.lt.s32.totalorder %s18, 1
      %s254 = scalar_select %p253, %s18, 1
      %p255 = scmp.lt.s32.totalorder %s252, 1
      %s256 = scalar_select %p255, %s252, 1
      %s257 = smul.addr %s254, 2
      %s258 = sadd.s32 %s256, %s257
      %s259 = smul.addr %s258, 8
      %s260 = scalar_lea.vmem %s1, %s259
      %s261 = smul.u32 2, %s19
      %s262 = smul.u32 2, %s19
      %p263 = scmp.lt.s32.totalorder %s18, 1
      %s264 = scalar_select %p263, %s18, 1
      %p265 = scmp.lt.s32.totalorder %s262, 1
      %s266 = scalar_select %p265, %s262, 1
      %s267 = smul.addr %s264, 2
      %s268 = sadd.s32 %s266, %s267
      %s269 = smul.addr %s268, 2
      %s270 = scalar_lea.vmem %s2, %s269
      %s271 = smul.u32 2, %s19
      %s272 = smul.u32 2, %s19
      %p273 = scmp.lt.s32.totalorder %s18, 1
      %s274 = scalar_select %p273, %s18, 1
      %p275 = scmp.lt.s32.totalorder %s272, 1
      %s276 = scalar_select %p275, %s272, 1
      %s277 = smul.addr %s274, 4
      %s278 = sadd.s32 %s276, %s277
      %s279 = smul.addr %s278, 8
      %s280 = scalar_lea.vmem %s3, %s279
      %s281 = smul.u32 2, %s19
      %v282 = vld [vmem:[%s250] sm:$0xff]
      %v284 = vcombine.high %v282, %v282
      %286 = vst [vmem:[%s280] sm:$0xf] %v282
      %287 = vst [vmem:[%s280 + $0x8] sm:$0xf] %v284
      %v288 = vld [vmem:[%s260] sm:$0x3f]
      %v289 = vld [vmem:[%s260 + $0x8] sm:$0x3f]
      %v292 = vrot.slane %v288, 4
      %v293 = vrot.slane %v289, 4
      %296 = vst [vmem:[%s280] sm:$0xf0] %v292
      %297 = vst [vmem:[%s280 + $0x8] sm:$0xf0] %v293
      %298 = vst [vmem:[%s280 + $0x10] sm:$0x3] %v292
      %299 = vst [vmem:[%s280 + $0x18] sm:$0x3] %v293
      %v300 = vld [vmem:[%s270] sm:$0xf]
      %v302 = vcombine.low %v300, %v300
      %v304 = vunpack.c.l.s4 1983009808
      %v305 = vunpack.c.0.s8 %v304
      %v306 = vlaneseq
      %v307 = vshrl.u32 %v306, 7
      %v308 = vsub.s32 %v305, %v307
      %v309 = vrot.slane %v302, %v308
      %v310 = vcombine.high %v309, %v309
      %313 = vst [vmem:[%s280 + $0x10] sm:$0xc] %v309
      %314 = vst [vmem:[%s280 + $0x18] sm:$0xc] %v310
      %s315 = smul.u32 2, %s19
      %p316 = scmp.lt.s32.totalorder %s18, 1
      %s317 = scalar_select %p316, %s18, 1
      %p318 = scmp.lt.s32.totalorder %s315, 1
      %s319 = scalar_select %p318, %s315, 1
      %s320 = smul.addr %s317, 4
      %s321 = sadd.s32 %s319, %s320
      %s322 = smul.addr %s321, 8
      %s323 = scalar_lea.vmem %s3, %s322
      // Predicated region
      $region33: #{tpu_custom_call.1} parent=31 // pred_check
        %p324 = pneg %p130
      $region34: #{tpu_custom_call.1} parent=31 // pred_check_branch
        %326 = sbr.rel (%p324) target = $region36
      $region35: #{tpu_custom_call.1} parent=31 // pred_region
        %s327 = smul.u32 2, %s19
      $region36: #{tpu_custom_call.1} parent=31 // pred_fallthru
        _
    $region32: #{tpu_custom_call.1} parent=5 // pred_fallthru
      _
    %p328 = scmp.le.s32.totalorder 2, %s9
    // Predicated region
    $region37: #{tpu_custom_call.1} parent=5 // pred_check
      %p329 = pneg %p328
    $region38: #{tpu_custom_call.1} parent=5 // pred_check_branch
      %331 = sbr.rel (%p329) target = $region40
    $region39: #{tpu_custom_call.1} parent=5 // pred_region
      %s332 = ssub.s32 %s9, 2
      // Predicated region
      $region41: #{tpu_custom_call.1} parent=39 // pred_check
        %p333 = pneg %p136
      $region42: #{tpu_custom_call.1} parent=39 // pred_check_branch
        %335 = sbr.rel (%p333) target = $region44
      $region43: #{tpu_custom_call.1} parent=39 // pred_region
        %s336 = smul.u32 2, %s21
        %p337 = scmp.lt.s32.totalorder %s20, 1
        %s338 = scalar_select %p337, %s20, 1
        %p339 = scmp.lt.s32.totalorder %s336, 1
        %s340 = scalar_select %p339, %s336, 1
        %s341 = smul.addr %s338, 4
        %s342 = sadd.s32 %s340, %s341
        %s343 = smul.addr %s342, 8
        %s344 = scalar_lea.vmem %s3, %s343
      $region44: #{tpu_custom_call.1} parent=39 // pred_fallthru
        _
    $region40: #{tpu_custom_call.1} parent=5 // pred_fallthru
      _
  $region6: #{tpu_custom_call.1} parent=0 // loop_footer
    %s13 = sadd.s32 1, %s9
  $region7: #{tpu_custom_call.1} parent=0 // loop_footer_branch
    %8 = sbr.rel target = $region3
  $region8: #{tpu_custom_call.1} parent=0 // loop_exit
    _

</llo_original>
